<compile_context>
chip_gen: v7x
topology: tpu7x:2x2x1
jax: 0.10.0
libtpu: 0.0.40
codegen_flags: <defaults>
</compile_context>

<pallas_src>
import math

import jax
import jax.numpy as jnp
from jax.experimental import pallas as pl
from jax.experimental.pallas import tpu as pltpu


# ------------------------------- Pallas kernel ------------------------------- #

def _transition_kernel(x_ref, scale_ref, shift_ref, pool_ref, w_ref, o_ref):
    """Fused Transition forward for one batch image.

    x_ref:     (1, C, H*W)       input image, channels-major (NCHW flattened)
    scale_ref: (C, 1)            BN scale  = gamma / sqrt(var + eps)
    shift_ref: (C, 1)            BN shift  = beta - mean * scale
    pool_ref:  (H*W, Ho*Wo)      constant 2x2/stride-2 average-pooling matrix (0.25)
    w_ref:     (Cout, C)         1x1 conv weight (PyTorch weight[:, :, 0, 0]), no bias
    o_ref:     (1, Cout, Ho*Wo)  output image (NCHW flattened)
    """
    # BN affine + ReLU prologue on the VPU (fused -> no HBM round trip).
    y = jnp.maximum(x_ref[0] * scale_ref[...] + shift_ref[...], 0.0)            # (C, HW)
    # 2x2 average pooling as a matmul on the MXU. Pooling happens BEFORE the 1x1
    # conv; they commute exactly (per-pixel linear conv, no bias, ReLU before pool).
    pooled = jnp.dot(y, pool_ref[...], preferred_element_type=jnp.float32)       # (C, HoWo)
    # 1x1 conv == channel matmul epilogue (MXU), operating on 4x fewer pixels.
    o_ref[0] = jnp.dot(w_ref[...], pooled, preferred_element_type=jnp.float32)   # (Cout, HoWo)


# ------------------------------ host-side helpers ---------------------------- #

def _pool_matrix(H, W):
    """(H*W, Ho*Wo) matrix P with P[p, q] = 0.25 iff pixel p lies in 2x2 window q.

    Matches F.avg_pool2d(x, 2): odd trailing rows/cols are dropped. Constant-folded
    under jit.
    """
    Ho, Wo = H // 2, W // 2
    hh = jnp.arange(H) // 2
    ww = jnp.arange(W) // 2
    valid = (hh < Ho)[:, None] & (ww < Wo)[None, :]
    q = jnp.where(valid, hh[:, None] * Wo + ww[None, :], Ho * Wo)   # sentinel = no window
    pm = q.reshape(H * W)[:, None] == jnp.arange(Ho * Wo)[None, :]
    return pm.astype(jnp.float32) * 0.25


def transition_forward(x, params, eps=1e-5):
    """Eval-mode Transition: avg_pool2d(conv1x1(relu(bn(x))), 2).

    x: (N, C, H, W) NCHW, same layout as the PyTorch module.
    Returns: (N, Cout, H//2, W//2) NCHW.
    """
    N, C, H, W = x.shape
    Ho, Wo = H // 2, W // 2
    w = params["conv_w"]                                   # (Cout, C)
    Cout = w.shape[0]

    # Fold eval-mode BatchNorm (running stats) into a per-channel affine.
    scale = params["bn_gamma"] / jnp.sqrt(params["bn_var"] + eps)
    shift = params["bn_beta"] - params["bn_mean"] * scale
    scale = scale.reshape(C, 1).astype(jnp.float32)
    shift = shift.reshape(C, 1).astype(jnp.float32)

    pool = _pool_matrix(H, W)                              # compile-time constant

    x_flat = x.reshape(N, C, H * W).astype(jnp.float32)    # free contiguous reshape

    out = pl.pallas_call(
        _transition_kernel,
        out_shape=jax.ShapeDtypeStruct((N, Cout, Ho * Wo), jnp.float32),
        grid=(N,),
        in_specs=[
            pl.BlockSpec((1, C, H * W), lambda n: (n, 0, 0)),
            pl.BlockSpec((C, 1), lambda n: (0, 0)),
            pl.BlockSpec((C, 1), lambda n: (0, 0)),
            pl.BlockSpec((H * W, Ho * Wo), lambda n: (0, 0)),
            pl.BlockSpec((Cout, C), lambda n: (0, 0)),
        ],
        out_specs=pl.BlockSpec((1, Cout, Ho * Wo), lambda n: (n, 0, 0)),
        compiler_params=pltpu.CompilerParams(
            dimension_semantics=("parallel",),   # batch across TensorCores on v7x
        ),
    )(x_flat, scale, shift, pool, w.astype(jnp.float32))

    return out.reshape(N, Cout, Ho, Wo)                    # free contiguous reshape


# ------------------------------- parameter init ------------------------------ #

def make_transition_params(key, nChannels, nOutChannels):
    # Conv2d(nChannels, nOutChannels, kernel_size=1, bias=False); DenseNet init:
    # weight ~ N(0, sqrt(2 / (k*k*nOut))) with k = 1. Stored as (Cout, Cin), i.e.
    # exactly torch weight[:, :, 0, 0] (no layout surprises when porting checkpoints).
    std = math.sqrt(2.0 / nOutChannels)
    conv_w = jax.random.normal(key, (nOutChannels, nChannels), jnp.float32) * std
    return {
        "conv_w": conv_w,
        # BatchNorm2d parameters / running stats (PyTorch defaults, eval mode).
        "bn_gamma": jnp.ones((nChannels,), jnp.float32),
        "bn_beta": jnp.zeros((nChannels,), jnp.float32),
        "bn_mean": jnp.zeros((nChannels,), jnp.float32),
        "bn_var": jnp.ones((nChannels,), jnp.float32),
    }


# --------------------------- pure-JAX reference check ------------------------ #

def transition_reference(x, params, eps=1e-5):
    g = params["bn_gamma"][None, :, None, None]
    b = params["bn_beta"][None, :, None, None]
    m = params["bn_mean"][None, :, None, None]
    v = params["bn_var"][None, :, None, None]
    y = jnp.maximum((x - m) / jnp.sqrt(v + eps) * g + b, 0.0)
    out = jnp.einsum("oc,nchw->nohw", params["conv_w"], y, precision="highest")
    N, O, H, W = out.shape
    return out.reshape(N, O, H // 2, 2, W // 2, 2).mean(axis=(3, 5))


# ------------------------------------ main ----------------------------------- #

if __name__ == "__main__":
    key = jax.random.PRNGKey(0)
    pkey, xkey = jax.random.split(key)

    # Shapes consistent with DenseNet usage of Transition: 12 -> floor(12*0.5) = 6.
    N, C, H, W = 2, 12, 16, 16
    Cout = 6

    params = make_transition_params(pkey, C, Cout)
    x = jax.random.normal(xkey, (N, C, H, W), jnp.float32)

    fwd = jax.jit(transition_forward)
    out = fwd(x, params)
    jax.block_until_ready(out)
    assert out.shape == (N, Cout, H // 2, W // 2), out.shape

    ref = transition_reference(x, params)
    max_err = float(jnp.max(jnp.abs(out - ref)))
    assert max_err < 5e-2, f"max abs error vs reference: {max_err}"

    print("KERNEL_OK")
</pallas_src>

<mosaic_0001>
module attributes {stable_mosaic.version = 11 : i64} {
  func.func @_transition_kernel(%arg0: i32, %arg1: memref<1x12x256xf32, #tpu.memory_space<vmem>>, %arg2: memref<12x1xf32, #tpu.memory_space<vmem>>, %arg3: memref<12x1xf32, #tpu.memory_space<vmem>>, %arg4: memref<256x64xf32, #tpu.memory_space<vmem>>, %arg5: memref<6x12xf32, #tpu.memory_space<vmem>>, %arg6: memref<1x6x64xf32, #tpu.memory_space<vmem>>) attributes {dimension_semantics = [#tpu.dimension_semantics<parallel>], iteration_bounds = array<i64: 2>, scalar_prefetch = 0 : i64, scratch_operands = 0 : i64, tpu.core_type = #tpu.core_type<tc>, window_params = [{transform_indices = @transform_0, window_bounds = array<i64: 1, 12, 256>}, {pipeline_mode = #tpu.pipeline_mode<synchronous>, transform_indices = @transform_1, window_bounds = array<i64: 12, 1>}, {pipeline_mode = #tpu.pipeline_mode<synchronous>, transform_indices = @transform_2, window_bounds = array<i64: 12, 1>}, {pipeline_mode = #tpu.pipeline_mode<synchronous>, transform_indices = @transform_3, window_bounds = array<i64: 256, 64>}, {pipeline_mode = #tpu.pipeline_mode<synchronous>, transform_indices = @transform_4, window_bounds = array<i64: 6, 12>}, {transform_indices = @transform_5, window_bounds = array<i64: 1, 6, 64>}]} {
    %c0 = arith.constant 0 : index
    %c0_0 = arith.constant 0 : index
    %c0_1 = arith.constant 0 : index
    %0 = vector.load %arg1[%c0, %c0_0, %c0_1] : memref<1x12x256xf32, #tpu.memory_space<vmem>>, vector<1x12x256xf32>
    %1 = vector.shape_cast %0 : vector<1x12x256xf32> to vector<12x256xf32>
    %c0_2 = arith.constant 0 : index
    %c0_3 = arith.constant 0 : index
    %2 = vector.load %arg2[%c0_2, %c0_3] : memref<12x1xf32, #tpu.memory_space<vmem>>, vector<12x1xf32>
    %3 = vector.broadcast %2 : vector<12x1xf32> to vector<12x256xf32>
    %4 = arith.mulf %1, %3 : vector<12x256xf32>
    %c0_4 = arith.constant 0 : index
    %c0_5 = arith.constant 0 : index
    %5 = vector.load %arg3[%c0_4, %c0_5] : memref<12x1xf32, #tpu.memory_space<vmem>>, vector<12x1xf32>
    %6 = vector.broadcast %5 : vector<12x1xf32> to vector<12x256xf32>
    %7 = arith.addf %4, %6 : vector<12x256xf32>
    %cst = arith.constant 0.000000e+00 : f32
    %8 = vector.broadcast %cst : f32 to vector<12x256xf32>
    %9 = arith.maximumf %7, %8 : vector<12x256xf32>
    %c0_6 = arith.constant 0 : index
    %c0_7 = arith.constant 0 : index
    %10 = vector.load %arg4[%c0_6, %c0_7] : memref<256x64xf32, #tpu.memory_space<vmem>>, vector<256x64xf32>
    %cst_8 = arith.constant dense<0.000000e+00> : vector<12x64xf32>
    %11 = tpu.matmul %9, %10, %cst_8 {dimension_numbers = #tpu.dot_dimension_numbers<[1], [0], [0], [1], [0, 0, 1, 1], [], []>} : vector<12x256xf32>, vector<256x64xf32>, vector<12x64xf32> -> vector<12x64xf32>
    %c0_9 = arith.constant 0 : index
    %c0_10 = arith.constant 0 : index
    %12 = vector.load %arg5[%c0_9, %c0_10] : memref<6x12xf32, #tpu.memory_space<vmem>>, vector<6x12xf32>
    %cst_11 = arith.constant dense<0.000000e+00> : vector<6x64xf32>
    %13 = tpu.matmul %12, %11, %cst_11 {dimension_numbers = #tpu.dot_dimension_numbers<[1], [0], [0], [1], [0, 0, 1, 1], [], []>} : vector<6x12xf32>, vector<12x64xf32>, vector<6x64xf32> -> vector<6x64xf32>
    %c0_12 = arith.constant 0 : index
    %c0_13 = arith.constant 0 : index
    %c0_14 = arith.constant 0 : index
    %14 = vector.load %arg6[%c0_12, %c0_13, %c0_14] : memref<1x6x64xf32, #tpu.memory_space<vmem>>, vector<1x6x64xf32>
    %15 = vector.shape_cast %14 : vector<1x6x64xf32> to vector<6x64xf32>
    %16 = vector.shape_cast %13 : vector<6x64xf32> to vector<1x6x64xf32>
    tpu.vector_store %arg6[%c0_12, %c0_13, %c0_14], %16 {strides = array<i32>} : memref<1x6x64xf32, #tpu.memory_space<vmem>>, vector<1x6x64xf32>,
    return
  }
  func.func @transform_0(%arg0: i32) -> (i32, i32, i32) {
    %c0_i32 = arith.constant 0 : i32
    %c0_i32_0 = arith.constant 0 : i32
    %c0_i32_1 = arith.constant 0 : i32
    return %arg0, %c0_i32, %c0_i32_0 : i32, i32, i32
  }
  func.func @transform_1(%arg0: i32) -> (i32, i32) {
    %c0_i32 = arith.constant 0 : i32
    %c0_i32_0 = arith.constant 0 : i32
    %c0_i32_1 = arith.constant 0 : i32
    return %c0_i32, %c0_i32_0 : i32, i32
  }
  func.func @transform_2(%arg0: i32) -> (i32, i32) {
    %c0_i32 = arith.constant 0 : i32
    %c0_i32_0 = arith.constant 0 : i32
    %c0_i32_1 = arith.constant 0 : i32
    return %c0_i32, %c0_i32_0 : i32, i32
  }
  func.func @transform_3(%arg0: i32) -> (i32, i32) {
    %c0_i32 = arith.constant 0 : i32
    %c0_i32_0 = arith.constant 0 : i32
    %c0_i32_1 = arith.constant 0 : i32
    return %c0_i32, %c0_i32_0 : i32, i32
  }
  func.func @transform_4(%arg0: i32) -> (i32, i32) {
    %c0_i32 = arith.constant 0 : i32
    %c0_i32_0 = arith.constant 0 : i32
    %c0_i32_1 = arith.constant 0 : i32
    return %c0_i32, %c0_i32_0 : i32, i32
  }
  func.func @transform_5(%arg0: i32) -> (i32, i32, i32) {
    %c0_i32 = arith.constant 0 : i32
    %c0_i32_0 = arith.constant 0 : i32
    %c0_i32_1 = arith.constant 0 : i32
    return %arg0, %c0_i32, %c0_i32_0 : i32, i32, i32
  }
}

</mosaic_0001>

<llo_original>
// kernel: transition_forward.1
$region0: #{transition_forward.1}
  #allocation0 [shape = 'u32[]', space=smem, size = 0x4, offset = 0x4, fixed_abs, tag = 'smem constant byte address 0x4 - core index']
  #allocation1 [shape = 'u32[144,128]{1,0:T(1,128)}', space=vmem, size = 0x12000, scoped, tag = 'internal scratch']
  %s0 = inlined_call_operand.vmem [shape: f32[2,12,256], index: 0, kind: input, shape index: {}]
  %s1 = inlined_call_operand.vmem [shape: f32[12,1], index: 1, kind: input, shape index: {}]
  %s2 = inlined_call_operand.vmem [shape: f32[12,1], index: 2, kind: input, shape index: {}]
  %s3 = inlined_call_operand.vmem [shape: f32[256,64], index: 3, kind: input, shape index: {}]
  %s4 = inlined_call_operand.vmem [shape: f32[6,12], index: 4, kind: input, shape index: {}]
  %s5 = inlined_call_operand.vmem [shape: f32[2,6,64], index: 5, kind: output, shape index: {}]
  %s6 = sld [smem:[#allocation0]]
  $region53: #{transition_forward.1} parent=0
    _
  %s8 = ssub.s32 1, %s6
  %s9 = scalar_select 0, %s8, %s6
  loop: start=0, step=1, limit=4
  $region2: #{transition_forward.1} parent=0 // loop_pre_header
    _
  $region3: #{transition_forward.1} parent=0 // loop_header
    %s11 = sphi 0, %s15
    %p12 = scmp.ge.s32.totalorder %s11, 4
    %s21 = sphi 0, %s23
    %s24 = sphi 0, %s21
    %s25 = sphi 0, %s24
    %s41 = sphi 0, %s25
    %s45 = sphi 0, %s45
    %s47 = sphi 0, %s45
    %s48 = sphi 0, %s47
    %s62 = sphi 0, %s48
    %s66 = sphi 0, %s66
    %s68 = sphi 0, %s66
    %s69 = sphi 0, %s68
    %s83 = sphi 0, %s69
    %s87 = sphi 0, %s87
    %s89 = sphi 0, %s87
    %s90 = sphi 0, %s89
    %s104 = sphi 0, %s90
    %s108 = sphi 0, %s108
    %s110 = sphi 0, %s108
    %s111 = sphi 0, %s110
    %s125 = sphi 0, %s111
    %s131 = sphi 0, %s133
    %s134 = sphi 0, %s131
    %s135 = sphi 0, %s134
    %s151 = sphi 0, %s135
  $region4: #{transition_forward.1} parent=0 // loop_header_branch
    %14 = sbr.rel (%p12) target = $region8
  $region5: #{transition_forward.1} parent=0 // loop_body
    %s16 = ssub.s32 %s11, 1
    %s17 = ssub.s32 %s11, 2
    %s18 = sadd.s32 %s11, 1
    %s19 = ssub.s32 %s11, %s18
    %p20 = scmp.eq.s32.totalorder %s19, 0
    %s22 = sadd.s32 %s21, 1
    %s23 = scalar_select %p20, %s21, %s22
    %p26 = pneg %p20
    %p27 = scmp.eq.s32.totalorder %s11, 1
    %p28 = por %p26, %p27
    %p29 = scmp.ne.s32.totalorder %s21, %s24
    %p30 = scmp.eq.s32.totalorder %s11, 0
    %p31 = por %p29, %p30
    %p32 = scmp.ne.s32.totalorder %s21, %s24
    %p33 = scmp.eq.s32.totalorder %s16, 1
    %p34 = por %p32, %p33
    %p35 = scmp.ne.s32.totalorder %s24, %s25
    %p36 = scmp.eq.s32.totalorder %s16, 0
    %p37 = por %p35, %p36
    %p38 = scmp.ne.s32.totalorder %s24, %s25
    %p39 = scmp.eq.s32.totalorder %s17, 1
    %p40 = por %p38, %p39
    %p42 = scmp.ne.s32.totalorder %s25, %s41
    %p43 = scmp.eq.s32.totalorder %s17, 0
    %p44 = por %p42, %p43
    %s46 = sadd.s32 %s45, 1
    %p49 = scmp.eq.s32.totalorder %s11, 1
    %p50 = scmp.ne.s32.totalorder %s45, %s47
    %p51 = scmp.eq.s32.totalorder %s11, 0
    %p52 = por %p50, %p51
    %p53 = scmp.ne.s32.totalorder %s45, %s47
    %p54 = scmp.eq.s32.totalorder %s16, 1
    %p55 = por %p53, %p54
    %p56 = scmp.ne.s32.totalorder %s47, %s48
    %p57 = scmp.eq.s32.totalorder %s16, 0
    %p58 = por %p56, %p57
    %p59 = scmp.ne.s32.totalorder %s47, %s48
    %p60 = scmp.eq.s32.totalorder %s17, 1
    %p61 = por %p59, %p60
    %p63 = scmp.ne.s32.totalorder %s48, %s62
    %p64 = scmp.eq.s32.totalorder %s17, 0
    %p65 = por %p63, %p64
    %s67 = sadd.s32 %s66, 1
    %p70 = scmp.eq.s32.totalorder %s11, 1
    %p71 = scmp.ne.s32.totalorder %s66, %s68
    %p72 = scmp.eq.s32.totalorder %s11, 0
    %p73 = por %p71, %p72
    %p74 = scmp.ne.s32.totalorder %s66, %s68
    %p75 = scmp.eq.s32.totalorder %s16, 1
    %p76 = por %p74, %p75
    %p77 = scmp.ne.s32.totalorder %s68, %s69
    %p78 = scmp.eq.s32.totalorder %s16, 0
    %p79 = por %p77, %p78
    %p80 = scmp.ne.s32.totalorder %s68, %s69
    %p81 = scmp.eq.s32.totalorder %s17, 1
    %p82 = por %p80, %p81
    %p84 = scmp.ne.s32.totalorder %s69, %s83
    %p85 = scmp.eq.s32.totalorder %s17, 0
    %p86 = por %p84, %p85
    %s88 = sadd.s32 %s87, 1
    %p91 = scmp.eq.s32.totalorder %s11, 1
    %p92 = scmp.ne.s32.totalorder %s87, %s89
    %p93 = scmp.eq.s32.totalorder %s11, 0
    %p94 = por %p92, %p93
    %p95 = scmp.ne.s32.totalorder %s87, %s89
    %p96 = scmp.eq.s32.totalorder %s16, 1
    %p97 = por %p95, %p96
    %p98 = scmp.ne.s32.totalorder %s89, %s90
    %p99 = scmp.eq.s32.totalorder %s16, 0
    %p100 = por %p98, %p99
    %p101 = scmp.ne.s32.totalorder %s89, %s90
    %p102 = scmp.eq.s32.totalorder %s17, 1
    %p103 = por %p101, %p102
    %p105 = scmp.ne.s32.totalorder %s90, %s104
    %p106 = scmp.eq.s32.totalorder %s17, 0
    %p107 = por %p105, %p106
    %s109 = sadd.s32 %s108, 1
    %p112 = scmp.eq.s32.totalorder %s11, 1
    %p113 = scmp.ne.s32.totalorder %s108, %s110
    %p114 = scmp.eq.s32.totalorder %s11, 0
    %p115 = por %p113, %p114
    %p116 = scmp.ne.s32.totalorder %s108, %s110
    %p117 = scmp.eq.s32.totalorder %s16, 1
    %p118 = por %p116, %p117
    %p119 = scmp.ne.s32.totalorder %s110, %s111
    %p120 = scmp.eq.s32.totalorder %s16, 0
    %p121 = por %p119, %p120
    %p122 = scmp.ne.s32.totalorder %s110, %s111
    %p123 = scmp.eq.s32.totalorder %s17, 1
    %p124 = por %p122, %p123
    %p126 = scmp.ne.s32.totalorder %s111, %s125
    %p127 = scmp.eq.s32.totalorder %s17, 0
    %p128 = por %p126, %p127
    %s129 = ssub.s32 %s11, %s18
    %p130 = scmp.eq.s32.totalorder %s129, 0
    %s132 = sadd.s32 %s131, 1
    %s133 = scalar_select %p130, %s131, %s132
    %p136 = pneg %p130
    %p137 = scmp.eq.s32.totalorder %s11, 1
    %p138 = por %p136, %p137
    %p139 = scmp.ne.s32.totalorder %s131, %s134
    %p140 = scmp.eq.s32.totalorder %s11, 0
    %p141 = por %p139, %p140
    %p142 = scmp.ne.s32.totalorder %s131, %s134
    %p143 = scmp.eq.s32.totalorder %s16, 1
    %p144 = por %p142, %p143
    %p145 = scmp.ne.s32.totalorder %s134, %s135
    %p146 = scmp.eq.s32.totalorder %s16, 0
    %p147 = por %p145, %p146
    %p148 = scmp.ne.s32.totalorder %s134, %s135
    %p149 = scmp.eq.s32.totalorder %s17, 1
    %p150 = por %p148, %p149
    %p152 = scmp.ne.s32.totalorder %s135, %s151
    %p153 = scmp.eq.s32.totalorder %s17, 0
    %p154 = por %p152, %p153
    %p155 = scmp.le.s32.totalorder 1, %s11
    %p156 = scmp.lt.s32.totalorder %s11, 3
    %p157 = pnand %p155, %p156
    %p158 = pneg %p157
    // Predicated region
    $region9: #{transition_forward.1} parent=5 // pred_check
      _
    $region10: #{transition_forward.1} parent=5 // pred_check_branch
      %160 = sbr.rel (%p157) target = $region12
    $region11: #{transition_forward.1} parent=5 // pred_region
      %s161 = ssub.s32 %s11, 1
      // Predicated region
      $region13: #{transition_forward.1} parent=11 // pred_check
        %p162 = pneg %p58
      $region14: #{transition_forward.1} parent=11 // pred_check_branch
        %164 = sbr.rel (%p162) target = $region16
      $region15: #{transition_forward.1} parent=11 // pred_region
        _
      $region16: #{transition_forward.1} parent=11 // pred_fallthru
        _
      // Predicated region
      $region17: #{transition_forward.1} parent=11 // pred_check
        %p165 = pneg %p79
      $region18: #{transition_forward.1} parent=11 // pred_check_branch
        %167 = sbr.rel (%p165) target = $region20
      $region19: #{transition_forward.1} parent=11 // pred_region
        _
      $region20: #{transition_forward.1} parent=11 // pred_fallthru
        _
      // Predicated region
      $region21: #{transition_forward.1} parent=11 // pred_check
        %p168 = pneg %p100
      $region22: #{transition_forward.1} parent=11 // pred_check_branch
        %170 = sbr.rel (%p168) target = $region24
      $region23: #{transition_forward.1} parent=11 // pred_region
        _
      $region24: #{transition_forward.1} parent=11 // pred_fallthru
        _
      // Predicated region
      $region25: #{transition_forward.1} parent=11 // pred_check
        %p171 = pneg %p121
      $region26: #{transition_forward.1} parent=11 // pred_check_branch
        %173 = sbr.rel (%p171) target = $region28
      $region27: #{transition_forward.1} parent=11 // pred_region
        _
      $region28: #{transition_forward.1} parent=11 // pred_fallthru
        _
    $region12: #{transition_forward.1} parent=5 // pred_fallthru
      _
    %p174 = scmp.lt.s32.totalorder %s11, 2
    // Predicated region
    $region29: #{transition_forward.1} parent=5 // pred_check
      %p175 = pneg %p174
    $region30: #{transition_forward.1} parent=5 // pred_check_branch
      %177 = sbr.rel (%p175) target = $region32
    $region31: #{transition_forward.1} parent=5 // pred_region
      // Predicated region
      $region33: #{transition_forward.1} parent=31 // pred_check
        %p178 = pneg %p31
      $region34: #{transition_forward.1} parent=31 // pred_check_branch
        %180 = sbr.rel (%p178) target = $region36
      $region35: #{transition_forward.1} parent=31 // pred_region
        %p181 = scmp.lt.s32.totalorder %s11, 1
        %s182 = scalar_select %p181, %s11, 1
        %s183 = smul.addr %s182, 4
        %s184 = smul.addr %s183, 8
        %s185 = scalar_lea.vmem %s0, %s184
      $region36: #{transition_forward.1} parent=31 // pred_fallthru
        _
    $region32: #{transition_forward.1} parent=5 // pred_fallthru
      _
    %p186 = scmp.le.s32.totalorder 1, %s11
    %p187 = scmp.lt.s32.totalorder %s11, 3
    %p188 = pnand %p186, %p187
    %p189 = pneg %p188
    // Predicated region
    $region37: #{transition_forward.1} parent=5 // pred_check
      _
    $region38: #{transition_forward.1} parent=5 // pred_check_branch
      %191 = sbr.rel (%p188) target = $region40
    $region39: #{transition_forward.1} parent=5 // pred_region
      %s192 = ssub.s32 %s11, 1
      %p193 = scmp.lt.s32.totalorder %s16, 1
      %s194 = scalar_select %p193, %s16, 1
      %s195 = smul.addr %s194, 4
      %s196 = smul.addr %s195, 8
      %s197 = scalar_lea.vmem %s0, %s196
      %p198 = pneg %p37
      %p199 = pneg %p34
      %p200 = pneg %p58
      %p201 = pneg %p55
      %p202 = pneg %p79
      %p203 = pneg %p76
      %p204 = pneg %p100
      %p205 = pneg %p97
      %p206 = pneg %p121
      %p207 = pneg %p118
      %p208 = pneg %p147
      %p209 = pneg %p144
      %p210 = scmp.lt.s32.totalorder %s16, 1
      %s211 = scalar_select %p210, %s16, 1
      %s212 = smul.addr %s211, 8
      %s213 = scalar_lea.vmem %s5, %s212
      %p214 = scmp.lt.s32.totalorder %s16, 1
      %s215 = scalar_select %p214, %s16, 1
      %s216 = smul.addr %s215, 4
      %s217 = smul.addr %s216, 8
      %s218 = scalar_lea.vmem %s0, %s217
      %p219 = scmp.lt.s32.totalorder %s16, 1
      %s220 = scalar_select %p219, %s16, 1
      %s221 = smul.addr %s220, 8
      %s222 = scalar_lea.vmem %s5, %s221
      %v223 = vld [vmem:[%s218] sm:$0xff]
      %v224 = vld [vmem:[%s218 + $0x8] sm:$0xff]
      %v225 = vld [vmem:[%s218 + $0x10] sm:$0xf]
      %v226 = vld [vmem:[%s218 + $0x18] sm:$0xf]
      %v227 = vld [vmem:[%s1] sm:$0xff]
      %v228 = vld [vmem:[%s1 + $0x8] sm:$0xf]
      %230 = vset.pattern.permute.xlu0 0
      %231 = vperm.xlu0 %230, %v227
      %v232 = vpop.permute.xlu0 %231
      %235 = vset.pattern.permute.xlu0 0
      %236 = vperm.xlu0 %235, %v228
      %v237 = vpop.permute.xlu0 %236
      %v239 = vmul.f32 %v223, %v232
      %v240 = vmul.f32 %v224, %v232
      %v241 = vmul.f32 %v225, %v237
      %v242 = vmul.f32 %v226, %v237
      %v243 = vld [vmem:[%s2] sm:$0xff]
      %v244 = vld [vmem:[%s2 + $0x8] sm:$0xf]
      %246 = vset.pattern.permute.xlu0 0
      %247 = vperm.xlu0 %246, %v243
      %v248 = vpop.permute.xlu0 %247
      %251 = vset.pattern.permute.xlu0 0
      %252 = vperm.xlu0 %251, %v244
      %v253 = vpop.permute.xlu0 %252
      %v255 = vadd.f32 %v239, %v248
      %v256 = vadd.f32 %v240, %v248
      %v257 = vadd.f32 %v241, %v253
      %v258 = vadd.f32 %v242, %v253
      %v259 = vmax.f32 %v255, 0.0
      %v260 = vmax.f32 %v256, 0.0
      %v261 = vmax.f32 %v257, 0.0
      %v262 = vmax.f32 %v258, 0.0
      %v263 = vld [vmem:[%s3] sm:$0xff]
      %v264 = vld [vmem:[%s3 + $0x8] sm:$0xff]
      %v265 = vld [vmem:[%s3 + $0x10] sm:$0xff]
      %v266 = vld [vmem:[%s3 + $0x18] sm:$0xff]
      %v267 = vld [vmem:[%s3 + $0x20] sm:$0xff]
      %v268 = vld [vmem:[%s3 + $0x28] sm:$0xff]
      %v269 = vld [vmem:[%s3 + $0x30] sm:$0xff]
      %v270 = vld [vmem:[%s3 + $0x38] sm:$0xff]
      %v271 = vld [vmem:[%s3 + $0x40] sm:$0xff]
      %v272 = vld [vmem:[%s3 + $0x48] sm:$0xff]
      %v273 = vld [vmem:[%s3 + $0x50] sm:$0xff]
      %v274 = vld [vmem:[%s3 + $0x58] sm:$0xff]
      %v275 = vld [vmem:[%s3 + $0x60] sm:$0xff]
      %v276 = vld [vmem:[%s3 + $0x68] sm:$0xff]
      %v277 = vld [vmem:[%s3 + $0x70] sm:$0xff]
      %v278 = vld [vmem:[%s3 + $0x78] sm:$0xff]
      %v279 = vld [vmem:[%s3 + $0x80] sm:$0xff]
      %v280 = vld [vmem:[%s3 + $0x88] sm:$0xff]
      %v281 = vld [vmem:[%s3 + $0x90] sm:$0xff]
      %v282 = vld [vmem:[%s3 + $0x98] sm:$0xff]
      %v283 = vld [vmem:[%s3 + $0xa0] sm:$0xff]
      %v284 = vld [vmem:[%s3 + $0xa8] sm:$0xff]
      %v285 = vld [vmem:[%s3 + $0xb0] sm:$0xff]
      %v286 = vld [vmem:[%s3 + $0xb8] sm:$0xff]
      %v287 = vld [vmem:[%s3 + $0xc0] sm:$0xff]
      %v288 = vld [vmem:[%s3 + $0xc8] sm:$0xff]
      %v289 = vld [vmem:[%s3 + $0xd0] sm:$0xff]
      %v290 = vld [vmem:[%s3 + $0xd8] sm:$0xff]
      %v291 = vld [vmem:[%s3 + $0xe0] sm:$0xff]
      %v292 = vld [vmem:[%s3 + $0xe8] sm:$0xff]
      %v293 = vld [vmem:[%s3 + $0xf0] sm:$0xff]
      %v294 = vld [vmem:[%s3 + $0xf8] sm:$0xff]
      %295 = vmatprep.subr.mxu0 0.0
      %296 = vmatpush1.msra.mxu0 %v263
      %297 = vmatprep.subr.mxu0 0.0
      %298 = vmatpush1.msra.mxu0 %v264
      %299 = vmatprep.subr.mxu0 0.0
      %300 = vmatpush1.msra.mxu0 %v265
      %301 = vmatprep.subr.mxu0 0.0
      %302 = vmatpush1.msra.mxu0 %v266
      %303 = vmatprep.subr.mxu0 0.0
      %304 = vmatpush1.msra.mxu0 %v267
      %305 = vmatprep.subr.mxu0 0.0
      %306 = vmatpush1.msra.mxu0 %v268
      %307 = vmatprep.subr.mxu0 0.0
      %308 = vmatpush1.msra.mxu0 %v269
      %309 = vmatprep.subr.mxu0 0.0
      %310 = vmatpush1.msra.mxu0 %v270
      %311 = vmatprep.subr.mxu0 0.0
      %312 = vmatpush1.msra.mxu0 %v271
      %313 = vmatprep.subr.mxu0 0.0
      %314 = vmatpush1.msra.mxu0 %v272
      %315 = vmatprep.subr.mxu0 0.0
      %316 = vmatpush1.msra.mxu0 %v273
      %317 = vmatprep.subr.mxu0 0.0
      %318 = vmatpush1.msra.mxu0 %v274
      %319 = vmatprep.subr.mxu0 0.0
      %320 = vmatpush1.msra.mxu0 %v275
      %321 = vmatprep.subr.mxu0 0.0
      %322 = vmatpush1.msra.mxu0 %v276
      %323 = vmatprep.subr.mxu0 0.0
      %324 = vmatpush1.msra.mxu0 %v277
      %325 = vmatprep.subr.mxu0 0.0
      %326 = vmatpush1.msra.mxu0 %v278
      %327 = vmatprep.subr.mxu0 0.0
      %328 = vmatpush1.msra.mxu0 %v279
      %329 = vmatprep.subr.mxu0 0.0
      %330 = vmatpush1.msra.mxu0 %v280
      %331 = vmatprep.subr.mxu0 0.0
      %332 = vmatpush1.msra.mxu0 %v281
      %333 = vmatprep.subr.mxu0 0.0
      %334 = vmatpush1.msra.mxu0 %v282
      %335 = vmatprep.subr.mxu0 0.0
      %336 = vmatpush1.msra.mxu0 %v283
      %337 = vmatprep.subr.mxu0 0.0
      %338 = vmatpush1.msra.mxu0 %v284
      %339 = vmatprep.subr.mxu0 0.0
      %340 = vmatpush1.msra.mxu0 %v285
      %341 = vmatprep.subr.mxu0 0.0
      %342 = vmatpush1.msra.mxu0 %v286
      %343 = vmatprep.subr.mxu0 0.0
      %344 = vmatpush1.msra.mxu0 %v287
      %345 = vmatprep.subr.mxu0 0.0
      %346 = vmatpush1.msra.mxu0 %v288
      %347 = vmatprep.subr.mxu0 0.0
      %348 = vmatpush1.msra.mxu0 %v289
      %349 = vmatprep.subr.mxu0 0.0
      %350 = vmatpush1.msra.mxu0 %v290
      %351 = vmatprep.subr.mxu0 0.0
      %352 = vmatpush1.msra.mxu0 %v291
      %353 = vmatprep.subr.mxu0 0.0
      %354 = vmatpush1.msra.mxu0 %v292
      %355 = vmatprep.subr.mxu0 0.0
      %356 = vmatpush1.msra.mxu0 %v293
      %357 = vmatprep.subr.mxu0 0.0
      %358 = vmatpush1.msra.mxu0 %v294
      %359 = vmatprep.mubr.f32.mxu0 %v260
      %360 = vmatmul.mubr.f32.gmra.mrb[0].mxu0 %v259
      %v361 = vpop.f32.mrb[0].mxu0
      %v362 = vadd.f32 0.0, %v361
      %v363 = vpop.f32.mrb[0].mxu0
      %364 = vmatprep.mubr.f32.mxu0 %v262
      %365 = vmatmul.mubr.f32.gmra.mrb[0].mxu0 %v261
      %v366 = vpop.f32.mrb[0].mxu0
      %v367 = vadd.f32 0.0, %v366
      %v368 = vpop.f32.mrb[0].mxu0
      %369 = vdwg.mxu0
      %v370 = vld [vmem:[%s4] sm:$0x3f]
      %vm371 = vcmask 97280
      %v373 = vsel %vm371, %v370, 0
      %vm375 = vcmask 1043456
      %v377 = vsel %vm375, %v367, 0
      %379 = vmatprep.subr.mxu0 0.0
      %380 = vmatpush1.msra.mxu0 %v362
      %381 = vmatprep.subr.mxu0 0.0
      %382 = vmatpush1.msra.mxu0 %v377
      %383 = vmatprep.subr.mxu0 0.0
      %384 = vmatpush1.msra.mxu0 0.0
      %385 = vmatprep.subr.mxu0 0.0
      %386 = vmatpush1.msra.mxu0 0.0
      %387 = vmatprep.subr.mxu0 0.0
      %388 = vmatpush1.msra.mxu0 0.0
      %389 = vmatprep.subr.mxu0 0.0
      %390 = vmatpush1.msra.mxu0 0.0
      %391 = vmatprep.subr.mxu0 0.0
      %392 = vmatpush1.msra.mxu0 0.0
      %393 = vmatprep.subr.mxu0 0.0
      %394 = vmatpush1.msra.mxu0 0.0
      %395 = vmatprep.subr.mxu0 0.0
      %396 = vmatpush1.msra.mxu0 0.0
      %397 = vmatprep.subr.mxu0 0.0
      %398 = vmatpush1.msra.mxu0 0.0
      %399 = vmatprep.subr.mxu0 0.0
      %400 = vmatpush1.msra.mxu0 0.0
      %401 = vmatprep.subr.mxu0 0.0
      %402 = vmatpush1.msra.mxu0 0.0
      %403 = vmatprep.subr.mxu0 0.0
      %404 = vmatpush1.msra.mxu0 0.0
      %405 = vmatprep.subr.mxu0 0.0
      %406 = vmatpush1.msra.mxu0 0.0
      %407 = vmatprep.subr.mxu0 0.0
      %408 = vmatpush1.msra.mxu0 0.0
      %409 = vmatprep.subr.mxu0 0.0
      %410 = vmatpush1.msra.mxu0 0.0
      %411 = vmatprep.subr.mxu0 0.0
      %412 = vmatpush1.msra.mxu0 0.0
      %413 = vmatprep.subr.mxu0 0.0
      %414 = vmatpush1.msra.mxu0 0.0
      %415 = vmatprep.subr.mxu0 0.0
      %416 = vmatpush1.msra.mxu0 0.0
      %417 = vmatprep.subr.mxu0 0.0
      %418 = vmatpush1.msra.mxu0 0.0
      %419 = vmatprep.subr.mxu0 0.0
      %420 = vmatpush1.msra.mxu0 0.0
      %421 = vmatprep.subr.mxu0 0.0
      %422 = vmatpush1.msra.mxu0 0.0
      %423 = vmatprep.subr.mxu0 0.0
      %424 = vmatpush1.msra.mxu0 0.0
      %425 = vmatprep.subr.mxu0 0.0
      %426 = vmatpush1.msra.mxu0 0.0
      %427 = vmatprep.subr.mxu0 0.0
      %428 = vmatpush1.msra.mxu0 0.0
      %429 = vmatprep.subr.mxu0 0.0
      %430 = vmatpush1.msra.mxu0 0.0
      %431 = vmatprep.subr.mxu0 0.0
      %432 = vmatpush1.msra.mxu0 0.0
      %433 = vmatprep.subr.mxu0 0.0
      %434 = vmatpush1.msra.mxu0 0.0
      %435 = vmatprep.subr.mxu0 0.0
      %436 = vmatpush1.msra.mxu0 0.0
      %437 = vmatprep.subr.mxu0 0.0
      %438 = vmatpush1.msra.mxu0 0.0
      %439 = vmatprep.subr.mxu0 0.0
      %440 = vmatpush1.msra.mxu0 0.0
      %441 = vmatprep.subr.mxu0 0.0
      %442 = vmatpush1.msra.mxu0 0.0
      %443 = vmatprep.mubr.f32.mxu0 0.0
      %444 = vmatmul.mubr.f32.gmra.mrb[0].mxu0 %v373
      %v445 = vpop.f32.mrb[0].mxu0
      %v446 = vadd.f32 0.0, %v445
      %v447 = vpop.f32.mrb[0].mxu0
      %448 = vdwg.mxu0
      %vm449 = vcmask 521216
      %450 = vst.msk [vmem:[%s222] sm:$0x3f] %vm449, %v446
      %p451 = scmp.lt.s32.totalorder %s16, 1
      %s452 = scalar_select %p451, %s16, 1
      %s453 = smul.addr %s452, 8
      %s454 = scalar_lea.vmem %s5, %s453
      // Predicated region
      $region41: #{transition_forward.1} parent=39 // pred_check
        %p455 = pneg %p144
      $region42: #{transition_forward.1} parent=39 // pred_check_branch
        %457 = sbr.rel (%p455) target = $region44
      $region43: #{transition_forward.1} parent=39 // pred_region
        _
      $region44: #{transition_forward.1} parent=39 // pred_fallthru
        _
    $region40: #{transition_forward.1} parent=5 // pred_fallthru
      _
    %p458 = scmp.le.s32.totalorder 2, %s11
    // Predicated region
    $region45: #{transition_forward.1} parent=5 // pred_check
      %p459 = pneg %p458
    $region46: #{transition_forward.1} parent=5 // pred_check_branch
      %461 = sbr.rel (%p459) target = $region48
    $region47: #{transition_forward.1} parent=5 // pred_region
      %s462 = ssub.s32 %s11, 2
      // Predicated region
      $region49: #{transition_forward.1} parent=47 // pred_check
        %p463 = pneg %p150
      $region50: #{transition_forward.1} parent=47 // pred_check_branch
        %465 = sbr.rel (%p463) target = $region52
      $region51: #{transition_forward.1} parent=47 // pred_region
        %p466 = scmp.lt.s32.totalorder %s17, 1
        %s467 = scalar_select %p466, %s17, 1
        %s468 = smul.addr %s467, 8
        %s469 = scalar_lea.vmem %s5, %s468
      $region52: #{transition_forward.1} parent=47 // pred_fallthru
        _
    $region48: #{transition_forward.1} parent=5 // pred_fallthru
      _
  $region6: #{transition_forward.1} parent=0 // loop_footer
    %s15 = sadd.s32 1, %s11
  $region7: #{transition_forward.1} parent=0 // loop_footer_branch
    %10 = sbr.rel target = $region3
  $region8: #{transition_forward.1} parent=0 // loop_exit
    _

</llo_original>
